<compile_context>
chip_gen: v7x
topology: tpu7x:2x2x1
jax: 0.10.0
libtpu: 0.0.40
codegen_flags: <defaults>
</compile_context>

<pallas_src>
import jax
import jax.numpy as jnp
from jax.experimental import pallas as pl
from jax.experimental.pallas import tpu as pltpu

LANES = 128  # vreg lane width


def linear_kernel(wb_ref, x_ref, o_ref):
    # wb_ref: (2,) f32 in SMEM -> scalar-path reads (no VMEM tiles / DMAs for params).
    w = wb_ref[0]
    b = wb_ref[1]
    # Lane-dense (br, 128) tile: single VPU multiply-add, unmasked full-width stores.
    o_ref[...] = x_ref[...] * w + b


def linear_forward(x, weight, bias, *, block_rows=2048):
    """nn.Linear(1, 1) forward: x (N, 1) f32, weight (1, 1) f32, bias (1,) f32 -> (N, 1)."""
    n = x.shape[0]
    dtype = x.dtype

    # --- lane-dense repack: (N, 1) -> (rows, 128), minimal padding -----------
    xf = x.reshape(-1)                     # (N,)
    total = xf.shape[0]
    rows = pl.cdiv(total, LANES)           # sublane rows needed
    pad = rows * LANES - total             # <= 127 elements

    if pad:
        xp = jnp.pad(xf, (0, pad)).reshape(rows, LANES)
    else:
        xp = xf.reshape(rows, LANES)       # copy-free view when N % 128 == 0

    # --- block-row sizing -----------------------------------------------------
    if rows <= 8:
        # Single full-extent block (legal even when rows % 8 != 0).
        br = rows
    else:
        # Multiple of 8 (sublane tiling); cap at 4096 rows so the double-buffered
        # in+out footprint (<= 2*2*4096*128*4B = 16 MiB) fits v5e's scoped VMEM.
        br = max(8, (min(block_rows, 4096) // 8) * 8)
        # Ensure >= 2 grid steps so the "parallel" axis shards across v7x's 2 TCs.
        half_rows = ((((rows + 1) // 2) + 7) // 8) * 8
        br = min(br, half_rows)

    grid = (pl.cdiv(rows, br),)            # ragged last block clamped by Pallas

    # --- pack W[0,0] and b[0] into one tiny SMEM scalar array ------------------
    wb = jnp.stack([weight.reshape(()), bias.reshape(())]).astype(dtype)   # (2,)

    out = pl.pallas_call(
        linear_kernel,
        out_shape=jax.ShapeDtypeStruct((rows, LANES), dtype),
        grid_spec=pltpu.PrefetchScalarGridSpec(
            num_scalar_prefetch=0,
            grid=grid,
            in_specs=[
                # params: whole (2,) array in SMEM, no tiling / no per-step DMA
                pl.BlockSpec(memory_space=pltpu.MemorySpace.SMEM),
                # data: lane-dense (br, 128) blocks, default double buffering
                pl.BlockSpec((br, LANES), lambda i: (i, 0)),
            ],
            out_specs=pl.BlockSpec((br, LANES), lambda i: (i, 0)),
        ),
        compiler_params=pltpu.CompilerParams(
            # elementwise + embarrassingly parallel: shard across TCs on v7x
            dimension_semantics=("parallel",),
        ),
        cost_estimate=pl.CostEstimate(
            flops=2 * rows * LANES,
            transcendentals=0,
            bytes_accessed=2 * rows * LANES * 4,
        ),
    )(wb, xp)

    # Undo padding only when it exists; otherwise the reshape is copy-free.
    if pad:
        return out.reshape(-1)[:total].reshape(n, 1)
    return out.reshape(n, 1)


if __name__ == "__main__":
    key = jax.random.PRNGKey(0)
    kx, kw, kb, kx2, kx3 = jax.random.split(key, 5)

    # Small shapes consistent with nn.Linear(1, 1): batch=8, in_features=1.
    x = jax.random.normal(kx, (8, 1), dtype=jnp.float32)

    # Deterministic parameter init (mimics nn.Linear uniform init bounds).
    weight = jax.random.uniform(kw, (1, 1), dtype=jnp.float32,
                                minval=-1.0, maxval=1.0)
    bias = jax.random.uniform(kb, (1,), dtype=jnp.float32,
                              minval=-1.0, maxval=1.0)

    y = linear_forward(x, weight, bias)
    y = jax.block_until_ready(y)
    y_ref = x @ weight.T + bias
    assert y.shape == (8, 1)
    assert jnp.allclose(y, y_ref, atol=1e-6), (y, y_ref)

    # Copy-free path (N % 128 == 0) + multi-step grid with small blocks.
    x2 = jax.random.normal(kx2, (4096, 1), dtype=jnp.float32)
    y2 = linear_forward(x2, weight, bias, block_rows=8)     # rows=32, br=8 -> grid=(4,)
    y2 = jax.block_until_ready(y2)
    y2_ref = x2 @ weight.T + bias
    assert y2.shape == (4096, 1)
    assert jnp.allclose(y2, y2_ref, atol=1e-6)

    # Lane-pad path + ragged last block + 2-way grid split (v7x sharding path).
    x3 = jax.random.normal(kx3, (3000, 1), dtype=jnp.float32)
    y3 = linear_forward(x3, weight, bias)                   # rows=24, br=16 -> grid=(2,)
    y3 = jax.block_until_ready(y3)
    y3_ref = x3 @ weight.T + bias
    assert y3.shape == (3000, 1)
    assert jnp.allclose(y3, y3_ref, atol=1e-6)

    print("KERNEL_OK")
</pallas_src>

<mosaic_0001>
module attributes {stable_mosaic.version = 11 : i64} {
  func.func @linear_kernel(%arg0: i32, %arg1: memref<2xf32, #tpu.memory_space<smem>>, %arg2: memref<1x128xf32, #tpu.memory_space<vmem>>, %arg3: memref<1x128xf32, #tpu.memory_space<vmem>>) attributes {dimension_semantics = [#tpu.dimension_semantics<parallel>], iteration_bounds = array<i64: 1>, scalar_prefetch = 0 : i64, scratch_operands = 0 : i64, tpu.core_type = #tpu.core_type<tc>, window_params = [{transform_indices = @transform_0, window_bounds = array<i64: 2>}, {transform_indices = @transform_1, window_bounds = array<i64: 1, 128>}, {transform_indices = @transform_2, window_bounds = array<i64: 1, 128>}]} {
    %c0 = arith.constant 0 : index
    %0 = memref.load %arg1[%c0] : memref<2xf32, #tpu.memory_space<smem>>
    %c1 = arith.constant 1 : index
    %1 = memref.load %arg1[%c1] : memref<2xf32, #tpu.memory_space<smem>>
    %c0_0 = arith.constant 0 : index
    %c0_1 = arith.constant 0 : index
    %2 = vector.load %arg2[%c0_0, %c0_1] : memref<1x128xf32, #tpu.memory_space<vmem>>, vector<1x128xf32>
    %3 = vector.broadcast %0 : f32 to vector<1x128xf32>
    %4 = arith.mulf %2, %3 : vector<1x128xf32>
    %5 = vector.broadcast %1 : f32 to vector<1x128xf32>
    %6 = arith.addf %4, %5 : vector<1x128xf32>
    %c0_2 = arith.constant 0 : index
    %c0_3 = arith.constant 0 : index
    %7 = vector.load %arg3[%c0_2, %c0_3] : memref<1x128xf32, #tpu.memory_space<vmem>>, vector<1x128xf32>
    tpu.vector_store %arg3[%c0_2, %c0_3], %6 {strides = array<i32>} : memref<1x128xf32, #tpu.memory_space<vmem>>, vector<1x128xf32>,
    return
  }
  func.func @transform_0(%arg0: i32) -> i32 {
    %c0_i32 = arith.constant 0 : i32
    %c0_i32_0 = arith.constant 0 : i32
    return %c0_i32 : i32
  }
  func.func @transform_1(%arg0: i32) -> (i32, i32) {
    %c0_i32 = arith.constant 0 : i32
    %c0_i32_0 = arith.constant 0 : i32
    return %arg0, %c0_i32 : i32, i32
  }
  func.func @transform_2(%arg0: i32) -> (i32, i32) {
    %c0_i32 = arith.constant 0 : i32
    %c0_i32_0 = arith.constant 0 : i32
    return %arg0, %c0_i32 : i32, i32
  }
}

</mosaic_0001>

<llo_original>
// kernel: tpu_custom_call.1
$region0: #{tpu_custom_call.1}
  #allocation0 [shape = 'u32[]', space=smem, size = 0x4, offset = 0x4, fixed_abs, tag = 'smem constant byte address 0x4 - core index']
  #allocation1 [shape = 'u32[144,128]{1,0:T(1,128)}', space=vmem, size = 0x12000, scoped, tag = 'internal scratch']
  %s0 = inlined_call_operand.hbm [shape: f32[2], index: 0, kind: input, shape index: {}]
  %s1 = inlined_call_operand.vmem [shape: f32[1,128], index: 1, kind: input, shape index: {}]
  %s2 = inlined_call_operand.hbm [shape: f32[1,128], index: 2, kind: output, shape index: {}]
  %s3 = sld [smem:[#allocation0]]
  $region22: #{tpu_custom_call.1} parent=0
    _
  %s5 = ssub.s32 1, %s3
  %s6 = scalar_select 0, %s5, %s3
  $region1: #{tpu_custom_call.1} parent=0
    #allocation2 [shape = 'u8[512]{0}', space=smem, size = 0x200, scoped, tag = 'input window, operand 0, single buffered']
    #allocation3 [shape = 's32[1]{0}', space=sflag, size = 0x4, scoped, tag = 'scoped memory for tpu_custom_call.1']
    #allocation4 [shape = 's32[1]{0}', space=sflag, size = 0x4, scoped, tag = 'scoped memory for tpu_custom_call.1']
    #allocation5 [shape = 'u8[512]{0}', space=vmem, size = 0x400, scoped, tag = 'output window, operand 0, single buffered']
    %7 = vsyncpa [#allocation4], 0
    %8 = vsyncpa [#allocation3], 0
    // Predicated region
    $region2: #{tpu_custom_call.1} parent=1 // pred_check
      _
    $region3: #{tpu_custom_call.1} parent=1 // pred_check_branch
      %10 = sbr.rel (0) target = $region5
    $region4: #{tpu_custom_call.1} parent=1 // pred_region
      %s12 = ssub.s32 16, 16
      %13 = vsyncadd [#allocation4], %s12
      %16 = dma.hbm_to_smem %s0, 16, [#allocation2], [#allocation4]
    $region5: #{tpu_custom_call.1} parent=1 // pred_fallthru
      _
    // Predicated region
    $region6: #{tpu_custom_call.1} parent=1 // pred_check
      _
    $region7: #{tpu_custom_call.1} parent=1 // pred_check_branch
      %18 = sbr.rel (0) target = $region9
    $region8: #{tpu_custom_call.1} parent=1 // pred_region
      _
    $region9: #{tpu_custom_call.1} parent=1 // pred_fallthru
      _
    // Predicated region
    $region10: #{tpu_custom_call.1} parent=1 // pred_check
      _
    $region11: #{tpu_custom_call.1} parent=1 // pred_check_branch
      %20 = sbr.rel (0) target = $region13
    $region12: #{tpu_custom_call.1} parent=1 // pred_region
      %21 = dma.done [#allocation4], 16
    $region13: #{tpu_custom_call.1} parent=1 // pred_fallthru
      _
    %22 = sfence
    %s23 = sld [smem:[#allocation2]]
    %s24 = sld [smem:[#allocation2 + $0x1]]
    %v25 = vld [vmem:[%s1] sm:$0x1]
    %v26 = vstv %s23
    %v27 = vmul.f32 %v25, %v26
    %v28 = vstv %s24
    %v29 = vadd.f32 %v27, %v28
    %30 = vst [vmem:[#allocation5] sm:$0x1] %v29
    // Predicated region
    $region14: #{tpu_custom_call.1} parent=1 // pred_check
      _
    $region15: #{tpu_custom_call.1} parent=1 // pred_check_branch
      %32 = sbr.rel (0) target = $region17
    $region16: #{tpu_custom_call.1} parent=1 // pred_region
      %s34 = ssub.s32 16, 16
      %35 = vsyncadd [#allocation3], %s34
      %s37 = sshll.u32 [#allocation5], 4
      %s38 = int_to_ptr.vmem [resolvable:$true] %s37
      %40 = dma.vmem_to_hbm [thread:$0]  %s38, 16, %s2, [#allocation3]
    $region17: #{tpu_custom_call.1} parent=1 // pred_fallthru
      _
    // Predicated region
    $region18: #{tpu_custom_call.1} parent=1 // pred_check
      _
    $region19: #{tpu_custom_call.1} parent=1 // pred_check_branch
      %42 = sbr.rel (0) target = $region21
    $region20: #{tpu_custom_call.1} parent=1 // pred_region
      %43 = dma.done [#allocation3], 16
    $region21: #{tpu_custom_call.1} parent=1 // pred_fallthru
      _
    %44 = vsyncpa [#allocation3], 1
    %45 = vsyncpa [#allocation4], 1

</llo_original>
